<compile_context>
chip_gen: v7x
topology: tpu7x:2x2x1
jax: 0.10.0
libtpu: 0.0.40
codegen_flags: <defaults>
</compile_context>

<pallas_src>
import functools

import jax
import jax.numpy as jnp
from jax.experimental import pallas as pl
from jax.experimental.pallas import tpu as pltpu

_LANE = 128
_SUBLANE = 8
_FALLBACK_VMEM_CAP = 64 * 1024 * 1024   # v7x per-TC capacity; safe lower bound everywhere


def _round_up(n, m):
    return ((n + m - 1) // m) * m


def _vmem_capacity_bytes():
    """Generation-aware VMEM capacity (128 MiB v5e/v6e, 64 MiB v7x)."""
    try:
        cap = getattr(pltpu.get_tpu_info(), "vmem_capacity_bytes", None)
        if cap:
            return int(cap)
    except Exception:
        pass
    return _FALLBACK_VMEM_CAP


def _check_single_buffer_support():
    """Can we request single-buffering (Buffered(1)) on a BlockSpec?"""
    if not hasattr(pl, "Buffered"):
        return False
    try:
        pl.BlockSpec((8, 128), lambda i: (0, 0), pipeline_mode=pl.Buffered(1))
        return True
    except Exception:
        return False


_SINGLE_BUFFER_OK = _check_single_buffer_support()


# --------------------------------------------------------------------------- #
# Kernel
# --------------------------------------------------------------------------- #
def _linear_softmax_kernel(x_ref, w_ref, mask_ref, o_ref, acc_ref, *,
                           valid_out, cast_bf16):
    # grid = (batch_tiles, k_tiles); axis 1 is the V (reduction) axis.
    # x_ref: (TB, TK)  w_ref: (O_pad, TK)  mask_ref: (1, O_pad)
    # o_ref: (TB, valid_out)  acc_ref: (TB, O_pad) f32 scratch
    k = pl.program_id(1)

    @pl.when(k == 0)
    def _init():
        acc_ref[...] = jnp.zeros_like(acc_ref)

    x = x_ref[...]
    w = w_ref[...]
    if cast_bf16:
        # In-kernel cast: full-rate MXU on v6e/v7x without an extra wrapper
        # pass over x in HBM; accumulation stays f32.
        x = x.astype(jnp.bfloat16)
        w = w.astype(jnp.bfloat16)

    # x @ W.T without materializing W.T: contract both operands over V (MXU,
    # f32 accumulation).
    acc_ref[...] += jax.lax.dot_general(
        x, w,
        dimension_numbers=(((1,), (1,)), ((), ())),
        preferred_element_type=jnp.float32,
    )

    @pl.when(k == pl.num_programs(1) - 1)
    def _finalize():
        # Additive pad mask (0 on real logits, -1e30 on zero-padded weight
        # rows) so padded columns contribute exactly 0 to the softmax.
        h = acc_ref[...] + mask_ref[...]
        m = jnp.max(h, axis=-1, keepdims=True)
        e = jnp.exp(h - m)
        d = jnp.sum(e, axis=-1, keepdims=True)
        p = e / d   # kernel is HBM-bound; the per-row divide is off the critical path
        # Store only the real output columns.  Rows past the true batch in a
        # partial last batch tile are computed on undefined data but discarded
        # by Pallas on writeback, so they never reach HBM.
        o_ref[...] = p[:, :valid_out].astype(o_ref.dtype)


# --------------------------------------------------------------------------- #
# Parameter prep (do ONCE at init, not per forward call)
# --------------------------------------------------------------------------- #
def prepare_params(weight, *, use_bf16_matmul=False):
    """Pad the output-feature axis of W to a lane multiple and build the
    additive pad-mask row.  Returns (w_prepared, pad_mask, output_size)."""
    output_size, vector_size = weight.shape
    o_pad = _round_up(max(output_size, _LANE), _LANE)
    w = weight
    if o_pad != output_size:
        w = jnp.pad(w, ((0, o_pad - output_size), (0, 0)))
    if use_bf16_matmul:
        w = w.astype(jnp.bfloat16)
    mask = jnp.where(jnp.arange(o_pad) < output_size, 0.0, -1e30)
    mask = mask.reshape(1, o_pad).astype(jnp.float32)
    return w, mask, output_size


# --------------------------------------------------------------------------- #
# Tiling selection
# --------------------------------------------------------------------------- #
def _pick_tiles(batch, vector_size, o_pad, output_size, x_isz, w_isz,
                block_batch, block_k, vmem_limit):
    """Choose (batch_tile, k_tile, num_k_tiles) under the VMEM budget."""
    tile_budget = (3 * vmem_limit) // 4     # ~25% headroom under the declared limit
    w_bufs_resident = 1 if _SINGLE_BUFFER_OK else 2

    # ---- reduction (V) tiling: keep W resident when it fits, else stream it
    if block_k is not None:
        tk = int(block_k)
    elif (w_bufs_resident * o_pad * vector_size * w_isz <= tile_budget // 2
          or vector_size % _LANE != 0):
        # TODO(synk): very large weights whose V is not a multiple of 128 would
        # need a V-pad (or online-softmax O-tiling); keep the weight resident.
        tk = vector_size
    else:
        # Largest 128-multiple divisor of V whose double-buffered weight slice
        # fits in half the budget.
        n128 = vector_size // _LANE
        d = n128
        while d > 1 and (n128 % d != 0
                         or 2 * o_pad * _LANE * d * w_isz > tile_budget // 2):
            d -= 1
        tk = _LANE * d
    nk = pl.cdiv(vector_size, tk)
    w_bufs = w_bufs_resident if nk == 1 else 2

    # ---- batch tiling
    tb = min(block_batch, batch)
    # Ensure >= 2 steps along the 'parallel' batch axis when the batch allows
    # it, so both v7x TensorCores get work.
    tb = min(tb, max(_SUBLANE, _round_up(pl.cdiv(batch, 2), _SUBLANE)))
    if tb < batch:
        tb = max(_SUBLANE, (tb // _SUBLANE) * _SUBLANE)

    def vmem_bytes(t):
        return (2 * t * tk * x_isz              # double-buffered x tile
                + w_bufs * o_pad * tk * w_isz   # weight block
                + 2 * t * output_size * 4       # double-buffered (unpadded) out tile
                + t * o_pad * 4                 # f32 logits accumulator (scratch)
                + 2 * o_pad * 4)                # pad-mask row

    while tb > _SUBLANE and vmem_bytes(tb) > tile_budget:
        new_tb = max(_SUBLANE, ((tb // 2) // _SUBLANE) * _SUBLANE)
        if new_tb == tb:
            break
        tb = new_tb
    return tb, tk, nk


# --------------------------------------------------------------------------- #
# Forward
# --------------------------------------------------------------------------- #
def neural_net_forward_prepared(x, w_prepared, pad_mask, output_size, *,
                                block_batch=512, block_k=None,
                                use_bf16_matmul=False):
    """softmax(x @ W.T, axis=1) with pre-prepared (padded) weight."""
    batch, vector_size = x.shape
    o_pad, wv = w_prepared.shape
    assert wv == vector_size, "weight must be [output_size(padded), vector_size]"
    assert pad_mask.shape == (1, o_pad)
    if block_k is not None:
        assert vector_size % block_k == 0 and (
            block_k == vector_size or block_k % _LANE == 0), \
            "block_k must divide vector_size and be a multiple of 128 (or == V)"

    vmem_cap = _vmem_capacity_bytes()
    vmem_limit = int((3 * vmem_cap) // 4)   # ~96 MiB on v5e/v6e, ~48 MiB on v7x

    x_isz = jnp.dtype(x.dtype).itemsize
    w_isz = jnp.dtype(w_prepared.dtype).itemsize
    tb, tk, nk = _pick_tiles(batch, vector_size, o_pad, output_size,
                             x_isz, w_isz, block_batch, block_k, vmem_limit)
    grid_b = pl.cdiv(batch, tb)

    kernel = functools.partial(_linear_softmax_kernel,
                               valid_out=output_size,
                               cast_bf16=use_bf16_matmul)

    def build(single_buffer_w):
        if single_buffer_w and _SINGLE_BUFFER_OK and nk == 1:
            # Resident weight never changes -> single-buffer it (halves its
            # VMEM footprint, frees room for a larger batch tile).
            w_spec = pl.BlockSpec((o_pad, tk), lambda i, k: (0, k),
                                  pipeline_mode=pl.Buffered(1))
        else:
            w_spec = pl.BlockSpec((o_pad, tk), lambda i, k: (0, k))
        return pl.pallas_call(
            kernel,
            out_shape=jax.ShapeDtypeStruct((batch, output_size), jnp.float32),
            grid=(grid_b, nk),
            in_specs=[
                pl.BlockSpec((tb, tk), lambda i, k: (i, k)),     # x tile
                w_spec,                                          # (padded) weight
                pl.BlockSpec((1, o_pad), lambda i, k: (0, 0)),   # pad-mask row
            ],
            out_specs=pl.BlockSpec((tb, output_size), lambda i, k: (i, 0)),
            scratch_shapes=[pltpu.VMEM((tb, o_pad), jnp.float32)],
            compiler_params=pltpu.CompilerParams(
                dimension_semantics=("parallel", "arbitrary"),
                vmem_limit_bytes=vmem_limit,
            ),
        )

    if _SINGLE_BUFFER_OK and nk == 1:
        try:
            return build(True)(x, w_prepared, pad_mask)
        except Exception:
            pass   # fall back to default double-buffering of the weight
    return build(False)(x, w_prepared, pad_mask)


def neural_net_forward(x, weight, *, block_batch=512, block_k=None,
                       use_bf16_matmul=False):
    """Convenience wrapper: softmax(x @ weight.T, axis=1).

    x:      [batch, vector_size] float32
    weight: [output_size, vector_size] (PyTorch nn.Linear layout, bias=False)

    Note: this prepares (pads/casts) the weight per call; production code
    should call prepare_params() once at init and use
    neural_net_forward_prepared() directly.
    """
    w_p, pad_mask, output_size = prepare_params(
        weight, use_bf16_matmul=use_bf16_matmul)
    return neural_net_forward_prepared(
        x, w_p, pad_mask, output_size,
        block_batch=block_batch, block_k=block_k,
        use_bf16_matmul=use_bf16_matmul)


def reference_forward(x, weight):
    return jax.nn.softmax(x @ weight.T, axis=1)


# --------------------------------------------------------------------------- #
# Demo / self-test
# --------------------------------------------------------------------------- #
if __name__ == "__main__":
    key = jax.random.PRNGKey(0)
    k_x, k_w, k_x2, k_w2 = jax.random.split(key, 4)

    # ---- Test 1: resident-weight path, prepare-once usage pattern ----------
    batch, vector_size, output_size = 8, 32, 4
    x = jax.random.normal(k_x, (batch, vector_size), dtype=jnp.float32)
    bound = 1.0 / float(vector_size) ** 0.5   # mimics nn.Linear's uniform init
    weight = jax.random.uniform(k_w, (output_size, vector_size),
                                dtype=jnp.float32, minval=-bound, maxval=bound)

    w_p, pad_mask, osz = prepare_params(weight)          # once, at "init"
    out = neural_net_forward_prepared(x, w_p, pad_mask, osz)
    out = jax.block_until_ready(out)

    ref = reference_forward(x, weight)
    assert out.shape == (batch, output_size)
    assert jnp.allclose(out, ref, atol=1e-4, rtol=1e-4), "mismatch vs reference (test 1)"
    assert jnp.allclose(jnp.sum(out, axis=1), 1.0, atol=1e-4), "rows must sum to 1"

    # ---- Test 2: streamed-weight (K-tiled reduction) path ------------------
    batch2, vector_size2, output_size2 = 16, 256, 4
    x2 = jax.random.normal(k_x2, (batch2, vector_size2), dtype=jnp.float32)
    bound2 = 1.0 / float(vector_size2) ** 0.5
    weight2 = jax.random.uniform(k_w2, (output_size2, vector_size2),
                                 dtype=jnp.float32, minval=-bound2, maxval=bound2)

    out2 = jax.block_until_ready(neural_net_forward(x2, weight2, block_k=128))
    ref2 = reference_forward(x2, weight2)
    assert out2.shape == (batch2, output_size2)
    assert jnp.allclose(out2, ref2, atol=1e-4, rtol=1e-4), "mismatch vs reference (test 2)"
    assert jnp.allclose(jnp.sum(out2, axis=1), 1.0, atol=1e-4), "rows must sum to 1"

    print("KERNEL_OK")
</pallas_src>

<mosaic_0001>
module attributes {stable_mosaic.version = 11 : i64} {
  func.func @_linear_softmax_kernel(%arg0: i32, %arg1: i32, %arg2: memref<8x32xf32, #tpu.memory_space<vmem>>, %arg3: memref<128x32xf32, #tpu.memory_space<vmem>>, %arg4: memref<1x128xf32, #tpu.memory_space<vmem>>, %arg5: memref<8x4xf32, #tpu.memory_space<vmem>>, %arg6: memref<8x128xf32, #tpu.memory_space<vmem>>) attributes {dimension_semantics = [#tpu.dimension_semantics<parallel>, #tpu.dimension_semantics<arbitrary>], iteration_bounds = array<i64: 1, 1>, scalar_prefetch = 0 : i64, scratch_operands = 1 : i64, tpu.core_type = #tpu.core_type<tc>, window_params = [{transform_indices = @transform_0, window_bounds = array<i64: 8, 32>}, {pipeline_mode = #tpu.pipeline_mode<synchronous>, transform_indices = @transform_1, window_bounds = array<i64: 128, 32>}, {pipeline_mode = #tpu.pipeline_mode<synchronous>, transform_indices = @transform_2, window_bounds = array<i64: 1, 128>}, {transform_indices = @transform_3, window_bounds = array<i64: 8, 4>}]} {
    %c0_i32 = arith.constant 0 : i32
    %0 = arith.cmpi eq, %arg1, %c0_i32 : i32
    %1 = arith.extui %0 : i1 to i32
    %c0_i32_0 = arith.constant 0 : i32
    %2 = arith.cmpi ne, %1, %c0_i32_0 : i32
    scf.if %2 {
      %cst_10 = arith.constant 0.000000e+00 : f32
      %12 = vector.broadcast %cst_10 : f32 to vector<8x128xf32>
      %c0_11 = arith.constant 0 : index
      %c0_12 = arith.constant 0 : index
      %13 = vector.load %arg6[%c0_11, %c0_12] : memref<8x128xf32, #tpu.memory_space<vmem>>, vector<8x128xf32>
      tpu.vector_store %arg6[%c0_11, %c0_12], %12 {strides = array<i32>} : memref<8x128xf32, #tpu.memory_space<vmem>>, vector<8x128xf32>,
    } else {
    }
    %c0 = arith.constant 0 : index
    %c0_1 = arith.constant 0 : index
    %3 = vector.load %arg2[%c0, %c0_1] : memref<8x32xf32, #tpu.memory_space<vmem>>, vector<8x32xf32>
    %c0_2 = arith.constant 0 : index
    %c0_3 = arith.constant 0 : index
    %4 = vector.load %arg3[%c0_2, %c0_3] : memref<128x32xf32, #tpu.memory_space<vmem>>, vector<128x32xf32>
    %c0_4 = arith.constant 0 : index
    %c0_5 = arith.constant 0 : index
    %5 = vector.load %arg6[%c0_4, %c0_5] : memref<8x128xf32, #tpu.memory_space<vmem>>, vector<8x128xf32>
    %cst = arith.constant dense<0.000000e+00> : vector<8x128xf32>
    %6 = tpu.matmul %3, %4, %cst {dimension_numbers = #tpu.dot_dimension_numbers<[1], [1], [0], [0], [0, 0, 1, 0], [], []>} : vector<8x32xf32>, vector<128x32xf32>, vector<8x128xf32> -> vector<8x128xf32>
    %7 = arith.addf %5, %6 : vector<8x128xf32>
    %c0_6 = arith.constant 0 : index
    %c0_7 = arith.constant 0 : index
    %8 = vector.load %arg6[%c0_6, %c0_7] : memref<8x128xf32, #tpu.memory_space<vmem>>, vector<8x128xf32>
    tpu.vector_store %arg6[%c0_6, %c0_7], %7 {strides = array<i32>} : memref<8x128xf32, #tpu.memory_space<vmem>>, vector<8x128xf32>,
    %c0_i32_8 = arith.constant 0 : i32
    %9 = arith.cmpi eq, %arg1, %c0_i32_8 : i32
    %10 = arith.extui %9 : i1 to i32
    %c0_i32_9 = arith.constant 0 : i32
    %11 = arith.cmpi ne, %10, %c0_i32_9 : i32
    scf.if %11 {
      %c0_10 = arith.constant 0 : index
      %c0_11 = arith.constant 0 : index
      %12 = vector.load %arg6[%c0_10, %c0_11] : memref<8x128xf32, #tpu.memory_space<vmem>>, vector<8x128xf32>
      %c0_12 = arith.constant 0 : index
      %c0_13 = arith.constant 0 : index
      %13 = vector.load %arg4[%c0_12, %c0_13] : memref<1x128xf32, #tpu.memory_space<vmem>>, vector<1x128xf32>
      %14 = vector.broadcast %13 : vector<1x128xf32> to vector<8x128xf32>
      %15 = arith.addf %12, %14 : vector<8x128xf32>
      %cst_14 = arith.constant dense<0xFF800000> : vector<8xf32>
      %16 = vector.multi_reduction <maximumf>, %15, %cst_14 [1] : vector<8x128xf32> to vector<8xf32>
      %17 = vector.shape_cast %16 : vector<8xf32> to vector<8x1xf32>
      %18 = vector.broadcast %17 : vector<8x1xf32> to vector<8x128xf32>
      %19 = arith.subf %15, %18 : vector<8x128xf32>
      %20 = math.exp %19 : vector<8x128xf32>
      %cst_15 = arith.constant dense<0.000000e+00> : vector<8xf32>
      %21 = vector.multi_reduction <add>, %20, %cst_15 [1] : vector<8x128xf32> to vector<8xf32>
      %22 = vector.shape_cast %21 : vector<8xf32> to vector<8x1xf32>
      %23 = vector.broadcast %22 : vector<8x1xf32> to vector<8x128xf32>
      %24 = arith.divf %20, %23 : vector<8x128xf32>
      %25 = vector.extract_strided_slice %24 {offsets = [0, 0], sizes = [8, 4], strides = [1, 1]} : vector<8x128xf32> to vector<8x4xf32>
      %c0_16 = arith.constant 0 : index
      %c0_17 = arith.constant 0 : index
      %26 = vector.load %arg5[%c0_16, %c0_17] : memref<8x4xf32, #tpu.memory_space<vmem>>, vector<8x4xf32>
      tpu.vector_store %arg5[%c0_16, %c0_17], %25 {strides = array<i32>} : memref<8x4xf32, #tpu.memory_space<vmem>>, vector<8x4xf32>,
    } else {
    }
    return
  }
  func.func @transform_0(%arg0: i32, %arg1: i32) -> (i32, i32) {
    %c0_i32 = arith.constant 0 : i32
    return %arg0, %arg1 : i32, i32
  }
  func.func @transform_1(%arg0: i32, %arg1: i32) -> (i32, i32) {
    %c0_i32 = arith.constant 0 : i32
    %c0_i32_0 = arith.constant 0 : i32
    return %c0_i32, %arg1 : i32, i32
  }
  func.func @transform_2(%arg0: i32, %arg1: i32) -> (i32, i32) {
    %c0_i32 = arith.constant 0 : i32
    %c0_i32_0 = arith.constant 0 : i32
    %c0_i32_1 = arith.constant 0 : i32
    return %c0_i32, %c0_i32_0 : i32, i32
  }
  func.func @transform_3(%arg0: i32, %arg1: i32) -> (i32, i32) {
    %c0_i32 = arith.constant 0 : i32
    %c0_i32_0 = arith.constant 0 : i32
    return %arg0, %c0_i32 : i32, i32
  }
}

module attributes {stable_mosaic.version = 11 : i64} {
  func.func @_linear_softmax_kernel(%arg0: i32, %arg1: i32, %arg2: memref<8x32xf32, #tpu.memory_space<vmem>>, %arg3: memref<128x32xf32, #tpu.memory_space<vmem>>, %arg4: memref<1x128xf32, #tpu.memory_space<vmem>>, %arg5: memref<8x4xf32, #tpu.memory_space<vmem>>, %arg6: memref<8x128xf32, #tpu.memory_space<vmem>>) attributes {dimension_semantics = [#tpu.dimension_semantics<parallel>, #tpu.dimension_semantics<arbitrary>], iteration_bounds = array<i64: 1, 1>, scalar_prefetch = 0 : i64, scratch_operands = 1 : i64, tpu.core_type = #tpu.core_type<tc>, window_params = [{transform_indices = @transform_0, window_bounds = array<i64: 8, 32>}, {transform_indices = @transform_1, window_bounds = array<i64: 128, 32>}, {pipeline_mode = #tpu.pipeline_mode<synchronous>, transform_indices = @transform_2, window_bounds = array<i64: 1, 128>}, {transform_indices = @transform_3, window_bounds = array<i64: 8, 4>}]} {
    %c0_i32 = arith.constant 0 : i32
    %0 = arith.cmpi eq, %arg1, %c0_i32 : i32
    %1 = arith.extui %0 : i1 to i32
    %c0_i32_0 = arith.constant 0 : i32
    %2 = arith.cmpi ne, %1, %c0_i32_0 : i32
    scf.if %2 {
      %cst_10 = arith.constant 0.000000e+00 : f32
      %12 = vector.broadcast %cst_10 : f32 to vector<8x128xf32>
      %c0_11 = arith.constant 0 : index
      %c0_12 = arith.constant 0 : index
      %13 = vector.load %arg6[%c0_11, %c0_12] : memref<8x128xf32, #tpu.memory_space<vmem>>, vector<8x128xf32>
      tpu.vector_store %arg6[%c0_11, %c0_12], %12 {strides = array<i32>} : memref<8x128xf32, #tpu.memory_space<vmem>>, vector<8x128xf32>,
    } else {
    }
    %c0 = arith.constant 0 : index
    %c0_1 = arith.constant 0 : index
    %3 = vector.load %arg2[%c0, %c0_1] : memref<8x32xf32, #tpu.memory_space<vmem>>, vector<8x32xf32>
    %c0_2 = arith.constant 0 : index
    %c0_3 = arith.constant 0 : index
    %4 = vector.load %arg3[%c0_2, %c0_3] : memref<128x32xf32, #tpu.memory_space<vmem>>, vector<128x32xf32>
    %c0_4 = arith.constant 0 : index
    %c0_5 = arith.constant 0 : index
    %5 = vector.load %arg6[%c0_4, %c0_5] : memref<8x128xf32, #tpu.memory_space<vmem>>, vector<8x128xf32>
    %cst = arith.constant dense<0.000000e+00> : vector<8x128xf32>
    %6 = tpu.matmul %3, %4, %cst {dimension_numbers = #tpu.dot_dimension_numbers<[1], [1], [0], [0], [0, 0, 1, 0], [], []>} : vector<8x32xf32>, vector<128x32xf32>, vector<8x128xf32> -> vector<8x128xf32>
    %7 = arith.addf %5, %6 : vector<8x128xf32>
    %c0_6 = arith.constant 0 : index
    %c0_7 = arith.constant 0 : index
    %8 = vector.load %arg6[%c0_6, %c0_7] : memref<8x128xf32, #tpu.memory_space<vmem>>, vector<8x128xf32>
    tpu.vector_store %arg6[%c0_6, %c0_7], %7 {strides = array<i32>} : memref<8x128xf32, #tpu.memory_space<vmem>>, vector<8x128xf32>,
    %c0_i32_8 = arith.constant 0 : i32
    %9 = arith.cmpi eq, %arg1, %c0_i32_8 : i32
    %10 = arith.extui %9 : i1 to i32
    %c0_i32_9 = arith.constant 0 : i32
    %11 = arith.cmpi ne, %10, %c0_i32_9 : i32
    scf.if %11 {
      %c0_10 = arith.constant 0 : index
      %c0_11 = arith.constant 0 : index
      %12 = vector.load %arg6[%c0_10, %c0_11] : memref<8x128xf32, #tpu.memory_space<vmem>>, vector<8x128xf32>
      %c0_12 = arith.constant 0 : index
      %c0_13 = arith.constant 0 : index
      %13 = vector.load %arg4[%c0_12, %c0_13] : memref<1x128xf32, #tpu.memory_space<vmem>>, vector<1x128xf32>
      %14 = vector.broadcast %13 : vector<1x128xf32> to vector<8x128xf32>
      %15 = arith.addf %12, %14 : vector<8x128xf32>
      %cst_14 = arith.constant dense<0xFF800000> : vector<8xf32>
      %16 = vector.multi_reduction <maximumf>, %15, %cst_14 [1] : vector<8x128xf32> to vector<8xf32>
      %17 = vector.shape_cast %16 : vector<8xf32> to vector<8x1xf32>
      %18 = vector.broadcast %17 : vector<8x1xf32> to vector<8x128xf32>
      %19 = arith.subf %15, %18 : vector<8x128xf32>
      %20 = math.exp %19 : vector<8x128xf32>
      %cst_15 = arith.constant dense<0.000000e+00> : vector<8xf32>
      %21 = vector.multi_reduction <add>, %20, %cst_15 [1] : vector<8x128xf32> to vector<8xf32>
      %22 = vector.shape_cast %21 : vector<8xf32> to vector<8x1xf32>
      %23 = vector.broadcast %22 : vector<8x1xf32> to vector<8x128xf32>
      %24 = arith.divf %20, %23 : vector<8x128xf32>
      %25 = vector.extract_strided_slice %24 {offsets = [0, 0], sizes = [8, 4], strides = [1, 1]} : vector<8x128xf32> to vector<8x4xf32>
      %c0_16 = arith.constant 0 : index
      %c0_17 = arith.constant 0 : index
      %26 = vector.load %arg5[%c0_16, %c0_17] : memref<8x4xf32, #tpu.memory_space<vmem>>, vector<8x4xf32>
      tpu.vector_store %arg5[%c0_16, %c0_17], %25 {strides = array<i32>} : memref<8x4xf32, #tpu.memory_space<vmem>>, vector<8x4xf32>,
    } else {
    }
    return
  }
  func.func @transform_0(%arg0: i32, %arg1: i32) -> (i32, i32) {
    %c0_i32 = arith.constant 0 : i32
    return %arg0, %arg1 : i32, i32
  }
  func.func @transform_1(%arg0: i32, %arg1: i32) -> (i32, i32) {
    %c0_i32 = arith.constant 0 : i32
    %c0_i32_0 = arith.constant 0 : i32
    return %c0_i32, %arg1 : i32, i32
  }
  func.func @transform_2(%arg0: i32, %arg1: i32) -> (i32, i32) {
    %c0_i32 = arith.constant 0 : i32
    %c0_i32_0 = arith.constant 0 : i32
    %c0_i32_1 = arith.constant 0 : i32
    return %c0_i32, %c0_i32_0 : i32, i32
  }
  func.func @transform_3(%arg0: i32, %arg1: i32) -> (i32, i32) {
    %c0_i32 = arith.constant 0 : i32
    %c0_i32_0 = arith.constant 0 : i32
    return %arg0, %c0_i32 : i32, i32
  }
}

</mosaic_0001>

<llo_original>
// kernel: tpu_custom_call.1
$region0: #{tpu_custom_call.1}
  #allocation0 [shape = 'u32[]', space=smem, size = 0x4, offset = 0x4, fixed_abs, tag = 'smem constant byte address 0x4 - core index']
  #allocation1 [shape = 'u32[144,128]{1,0:T(1,128)}', space=vmem, size = 0x12000, scoped, tag = 'internal scratch']
  #allocation2 [shape = 'f32[8,128]{1,0:T(8,128)}', space=vmem, size = 0x1000, scoped, tag = 'scratch operand']
  %s0 = inlined_call_operand.vmem [shape: f32[8,32], index: 0, kind: input, shape index: {}]
  %s1 = inlined_call_operand.vmem [shape: f32[128,32], index: 1, kind: input, shape index: {}]
  %s2 = inlined_call_operand.vmem [shape: f32[1,128], index: 2, kind: input, shape index: {}]
  %s3 = inlined_call_operand.vmem [shape: f32[8,4], index: 3, kind: output, shape index: {}]
  %s4 = sld [smem:[#allocation0]]
  $region30: #{tpu_custom_call.1} parent=0
    _
  %s6 = ssub.s32 1, %s4
  %s7 = scalar_select 0, %s6, %s4
  // Predicated region
  $region2: #{tpu_custom_call.1} parent=0 // pred_check
    _
  $region3: #{tpu_custom_call.1} parent=0 // pred_check_branch
    %9 = sbr.rel (0) target = $region5
  $region4: #{tpu_custom_call.1} parent=0 // pred_region
    _
  $region5: #{tpu_custom_call.1} parent=0 // pred_fallthru
    _
  // Predicated region
  $region6: #{tpu_custom_call.1} parent=0 // pred_check
    _
  $region7: #{tpu_custom_call.1} parent=0 // pred_check_branch
    %11 = sbr.rel (0) target = $region9
  $region8: #{tpu_custom_call.1} parent=0 // pred_region
    _
  $region9: #{tpu_custom_call.1} parent=0 // pred_fallthru
    _
  // Predicated region
  $region10: #{tpu_custom_call.1} parent=0 // pred_check
    _
  $region11: #{tpu_custom_call.1} parent=0 // pred_check_branch
    %13 = sbr.rel (0) target = $region13
  $region12: #{tpu_custom_call.1} parent=0 // pred_region
    _
  $region13: #{tpu_custom_call.1} parent=0 // pred_fallthru
    _
  %p14 = scmp.eq.s32.totalorder 0, 0
  // Predicated region
  $region14: #{tpu_custom_call.1} parent=0 // pred_check
    %p15 = pneg %p14
  $region15: #{tpu_custom_call.1} parent=0 // pred_check_branch
    %17 = sbr.rel (%p15) target = $region17
  $region16: #{tpu_custom_call.1} parent=0 // pred_region
    %18 = vst [vmem:[#allocation2] sm:$0xff] 0.0
  $region17: #{tpu_custom_call.1} parent=0 // pred_fallthru
    _
  %v19 = vld [vmem:[%s0] sm:$0xff]
  %v20 = vld [vmem:[%s1] sm:$0xff]
  %v21 = vld [vmem:[%s1 + $0x8] sm:$0xff]
  %v22 = vld [vmem:[%s1 + $0x10] sm:$0xff]
  %v23 = vld [vmem:[%s1 + $0x18] sm:$0xff]
  %v24 = vld [vmem:[%s1 + $0x20] sm:$0xff]
  %v25 = vld [vmem:[%s1 + $0x28] sm:$0xff]
  %v26 = vld [vmem:[%s1 + $0x30] sm:$0xff]
  %v27 = vld [vmem:[%s1 + $0x38] sm:$0xff]
  %v28 = vld [vmem:[%s1 + $0x40] sm:$0xff]
  %v29 = vld [vmem:[%s1 + $0x48] sm:$0xff]
  %v30 = vld [vmem:[%s1 + $0x50] sm:$0xff]
  %v31 = vld [vmem:[%s1 + $0x58] sm:$0xff]
  %v32 = vld [vmem:[%s1 + $0x60] sm:$0xff]
  %v33 = vld [vmem:[%s1 + $0x68] sm:$0xff]
  %v34 = vld [vmem:[%s1 + $0x70] sm:$0xff]
  %v35 = vld [vmem:[%s1 + $0x78] sm:$0xff]
  %v36 = vld [vmem:[#allocation2] sm:$0xff]
  %vm37 = vcmask 261120
  %v39 = vsel %vm37, %v19, 0
  %v42 = vsel %vm37, %v20, 0
  %v45 = vsel %vm37, %v21, 0
  %v48 = vsel %vm37, %v22, 0
  %v51 = vsel %vm37, %v23, 0
  %v54 = vsel %vm37, %v24, 0
  %v57 = vsel %vm37, %v25, 0
  %v60 = vsel %vm37, %v26, 0
  %v63 = vsel %vm37, %v27, 0
  %v66 = vsel %vm37, %v28, 0
  %v69 = vsel %vm37, %v29, 0
  %v72 = vsel %vm37, %v30, 0
  %v75 = vsel %vm37, %v31, 0
  %v78 = vsel %vm37, %v32, 0
  %v81 = vsel %vm37, %v33, 0
  %v84 = vsel %vm37, %v34, 0
  %v87 = vsel %vm37, %v35, 0
  %89 = vmatprep.subr.mxu0 0.0
  %90 = vmatpush1.xpose.msra.mxu0 %v42
  %91 = vmatprep.subr.mxu0 0.0
  %92 = vmatpush1.xpose.msra.mxu0 %v45
  %93 = vmatprep.subr.mxu0 0.0
  %94 = vmatpush1.xpose.msra.mxu0 %v48
  %95 = vmatprep.subr.mxu0 0.0
  %96 = vmatpush1.xpose.msra.mxu0 %v51
  %97 = vmatprep.subr.mxu0 0.0
  %98 = vmatpush1.xpose.msra.mxu0 %v54
  %99 = vmatprep.subr.mxu0 0.0
  %100 = vmatpush1.xpose.msra.mxu0 %v57
  %101 = vmatprep.subr.mxu0 0.0
  %102 = vmatpush1.xpose.msra.mxu0 %v60
  %103 = vmatprep.subr.mxu0 0.0
  %104 = vmatpush1.xpose.msra.mxu0 %v63
  %105 = vmatprep.subr.mxu0 0.0
  %106 = vmatpush1.xpose.msra.mxu0 %v66
  %107 = vmatprep.subr.mxu0 0.0
  %108 = vmatpush1.xpose.msra.mxu0 %v69
  %109 = vmatprep.subr.mxu0 0.0
  %110 = vmatpush1.xpose.msra.mxu0 %v72
  %111 = vmatprep.subr.mxu0 0.0
  %112 = vmatpush1.xpose.msra.mxu0 %v75
  %113 = vmatprep.subr.mxu0 0.0
  %114 = vmatpush1.xpose.msra.mxu0 %v78
  %115 = vmatprep.subr.mxu0 0.0
  %116 = vmatpush1.xpose.msra.mxu0 %v81
  %117 = vmatprep.subr.mxu0 0.0
  %118 = vmatpush1.xpose.msra.mxu0 %v84
  %119 = vmatprep.subr.mxu0 0.0
  %120 = vmatpush1.xpose.msra.mxu0 %v87
  %121 = vmatprep.subr.mxu0 0.0
  %122 = vmatpush1.xpose.msra.mxu0 0.0
  %123 = vmatprep.subr.mxu0 0.0
  %124 = vmatpush1.xpose.msra.mxu0 0.0
  %125 = vmatprep.subr.mxu0 0.0
  %126 = vmatpush1.xpose.msra.mxu0 0.0
  %127 = vmatprep.subr.mxu0 0.0
  %128 = vmatpush1.xpose.msra.mxu0 0.0
  %129 = vmatprep.subr.mxu0 0.0
  %130 = vmatpush1.xpose.msra.mxu0 0.0
  %131 = vmatprep.subr.mxu0 0.0
  %132 = vmatpush1.xpose.msra.mxu0 0.0
  %133 = vmatprep.subr.mxu0 0.0
  %134 = vmatpush1.xpose.msra.mxu0 0.0
  %135 = vmatprep.subr.mxu0 0.0
  %136 = vmatpush1.xpose.msra.mxu0 0.0
  %137 = vmatprep.subr.mxu0 0.0
  %138 = vmatpush1.xpose.msra.mxu0 0.0
  %139 = vmatprep.subr.mxu0 0.0
  %140 = vmatpush1.xpose.msra.mxu0 0.0
  %141 = vmatprep.subr.mxu0 0.0
  %142 = vmatpush1.xpose.msra.mxu0 0.0
  %143 = vmatprep.subr.mxu0 0.0
  %144 = vmatpush1.xpose.msra.mxu0 0.0
  %145 = vmatprep.subr.mxu0 0.0
  %146 = vmatpush1.xpose.msra.mxu0 0.0
  %147 = vmatprep.subr.mxu0 0.0
  %148 = vmatpush1.xpose.msra.mxu0 0.0
  %149 = vmatprep.subr.mxu0 0.0
  %150 = vmatpush1.xpose.msra.mxu0 0.0
  %151 = vmatprep.subr.mxu0 0.0
  %152 = vmatpush1.xpose.msra.mxu0 0.0
  %153 = vmatprep.mubr.f32.mxu0 0.0
  %154 = vmatmul.mubr.f32.gmra.mrb[0].mxu0 %v39
  %v155 = vpop.f32.mrb[0].mxu0
  %v156 = vadd.f32 0.0, %v155
  %v157 = vpop.f32.mrb[0].mxu0
  %158 = vdwg.mxu0
  %v159 = vadd.f32 %v36, %v156
  %160 = vst [vmem:[#allocation2] sm:$0xff] %v159
  // Predicated region
  $region18: #{tpu_custom_call.1} parent=0 // pred_check
    %p161 = pneg %p14
  $region19: #{tpu_custom_call.1} parent=0 // pred_check_branch
    %163 = sbr.rel (%p161) target = $region21
  $region20: #{tpu_custom_call.1} parent=0 // pred_region
    %v164 = vld [vmem:[#allocation2] sm:$0xff]
    %v165 = vld [vmem:[%s2] sm:$0x1]
    %v167 = vlaneseq
    %v168 = vshrl.u32 %v167, 7
    %v169 = vsub.s32 0, %v168
    %v170 = vrot.slane %v165, %v169
    %v172 = vadd.f32 %v164, %v170
    %173 = vmax.xlane.f32.xlu0 %v172
    %v174 = vpop.xlane.xlu0 %173
    %v175 = vsub.f32 %v172, %v174
    %v176 = vmul.f32 %v175, 1.442695
    %v177 = vpow.pop %v176
    %178 = vadd.xlane.f32.xlu0 %v177
    %v179 = vpop.xlane.xlu0 %178
    %v180 = vrcp.pop %v179
    %v181 = vmul.f32 %v177, %v180
    %vm182 = vcmask 31744
    %183 = vst.msk [vmem:[%s3] sm:$0xff] %vm182, %v181
  $region21: #{tpu_custom_call.1} parent=0 // pred_fallthru
    _
  // Predicated region
  $region22: #{tpu_custom_call.1} parent=0 // pred_check
    _
  $region23: #{tpu_custom_call.1} parent=0 // pred_check_branch
    %185 = sbr.rel (0) target = $region25
  $region24: #{tpu_custom_call.1} parent=0 // pred_region
    _
  $region25: #{tpu_custom_call.1} parent=0 // pred_fallthru
    _
  // Predicated region
  $region26: #{tpu_custom_call.1} parent=0 // pred_check
    _
  $region27: #{tpu_custom_call.1} parent=0 // pred_check_branch
    %187 = sbr.rel (0) target = $region29
  $region28: #{tpu_custom_call.1} parent=0 // pred_region
    _
  $region29: #{tpu_custom_call.1} parent=0 // pred_fallthru
    _

// kernel: tpu_custom_call.1
$region0: #{tpu_custom_call.1}
  #allocation0 [shape = 'u32[]', space=smem, size = 0x4, offset = 0x4, fixed_abs, tag = 'smem constant byte address 0x4 - core index']
  #allocation1 [shape = 'u32[144,128]{1,0:T(1,128)}', space=vmem, size = 0x12000, scoped, tag = 'internal scratch']
  #allocation2 [shape = 'f32[8,128]{1,0:T(8,128)}', space=vmem, size = 0x1000, scoped, tag = 'scratch operand']
  %s0 = inlined_call_operand.vmem [shape: f32[8,32], index: 0, kind: input, shape index: {}]
  %s1 = inlined_call_operand.vmem [shape: f32[128,32], index: 1, kind: input, shape index: {}]
  %s2 = inlined_call_operand.vmem [shape: f32[1,128], index: 2, kind: input, shape index: {}]
  %s3 = inlined_call_operand.vmem [shape: f32[8,4], index: 3, kind: output, shape index: {}]
  %s4 = sld [smem:[#allocation0]]
  $region30: #{tpu_custom_call.1} parent=0
    _
  %s6 = ssub.s32 1, %s4
  %s7 = scalar_select 0, %s6, %s4
  // Predicated region
  $region2: #{tpu_custom_call.1} parent=0 // pred_check
    _
  $region3: #{tpu_custom_call.1} parent=0 // pred_check_branch
    %9 = sbr.rel (0) target = $region5
  $region4: #{tpu_custom_call.1} parent=0 // pred_region
    _
  $region5: #{tpu_custom_call.1} parent=0 // pred_fallthru
    _
  // Predicated region
  $region6: #{tpu_custom_call.1} parent=0 // pred_check
    _
  $region7: #{tpu_custom_call.1} parent=0 // pred_check_branch
    %11 = sbr.rel (0) target = $region9
  $region8: #{tpu_custom_call.1} parent=0 // pred_region
    _
  $region9: #{tpu_custom_call.1} parent=0 // pred_fallthru
    _
  // Predicated region
  $region10: #{tpu_custom_call.1} parent=0 // pred_check
    _
  $region11: #{tpu_custom_call.1} parent=0 // pred_check_branch
    %13 = sbr.rel (0) target = $region13
  $region12: #{tpu_custom_call.1} parent=0 // pred_region
    _
  $region13: #{tpu_custom_call.1} parent=0 // pred_fallthru
    _
  %p14 = scmp.eq.s32.totalorder 0, 0
  // Predicated region
  $region14: #{tpu_custom_call.1} parent=0 // pred_check
    %p15 = pneg %p14
  $region15: #{tpu_custom_call.1} parent=0 // pred_check_branch
    %17 = sbr.rel (%p15) target = $region17
  $region16: #{tpu_custom_call.1} parent=0 // pred_region
    %18 = vst [vmem:[#allocation2] sm:$0xff] 0.0
  $region17: #{tpu_custom_call.1} parent=0 // pred_fallthru
    _
  %v19 = vld [vmem:[%s0] sm:$0xff]
  %v20 = vld [vmem:[%s1] sm:$0xff]
  %v21 = vld [vmem:[%s1 + $0x8] sm:$0xff]
  %v22 = vld [vmem:[%s1 + $0x10] sm:$0xff]
  %v23 = vld [vmem:[%s1 + $0x18] sm:$0xff]
  %v24 = vld [vmem:[%s1 + $0x20] sm:$0xff]
  %v25 = vld [vmem:[%s1 + $0x28] sm:$0xff]
  %v26 = vld [vmem:[%s1 + $0x30] sm:$0xff]
  %v27 = vld [vmem:[%s1 + $0x38] sm:$0xff]
  %v28 = vld [vmem:[%s1 + $0x40] sm:$0xff]
  %v29 = vld [vmem:[%s1 + $0x48] sm:$0xff]
  %v30 = vld [vmem:[%s1 + $0x50] sm:$0xff]
  %v31 = vld [vmem:[%s1 + $0x58] sm:$0xff]
  %v32 = vld [vmem:[%s1 + $0x60] sm:$0xff]
  %v33 = vld [vmem:[%s1 + $0x68] sm:$0xff]
  %v34 = vld [vmem:[%s1 + $0x70] sm:$0xff]
  %v35 = vld [vmem:[%s1 + $0x78] sm:$0xff]
  %v36 = vld [vmem:[#allocation2] sm:$0xff]
  %vm37 = vcmask 261120
  %v39 = vsel %vm37, %v19, 0
  %v42 = vsel %vm37, %v20, 0
  %v45 = vsel %vm37, %v21, 0
  %v48 = vsel %vm37, %v22, 0
  %v51 = vsel %vm37, %v23, 0
  %v54 = vsel %vm37, %v24, 0
  %v57 = vsel %vm37, %v25, 0
  %v60 = vsel %vm37, %v26, 0
  %v63 = vsel %vm37, %v27, 0
  %v66 = vsel %vm37, %v28, 0
  %v69 = vsel %vm37, %v29, 0
  %v72 = vsel %vm37, %v30, 0
  %v75 = vsel %vm37, %v31, 0
  %v78 = vsel %vm37, %v32, 0
  %v81 = vsel %vm37, %v33, 0
  %v84 = vsel %vm37, %v34, 0
  %v87 = vsel %vm37, %v35, 0
  %89 = vmatprep.subr.mxu0 0.0
  %90 = vmatpush1.xpose.msra.mxu0 %v42
  %91 = vmatprep.subr.mxu0 0.0
  %92 = vmatpush1.xpose.msra.mxu0 %v45
  %93 = vmatprep.subr.mxu0 0.0
  %94 = vmatpush1.xpose.msra.mxu0 %v48
  %95 = vmatprep.subr.mxu0 0.0
  %96 = vmatpush1.xpose.msra.mxu0 %v51
  %97 = vmatprep.subr.mxu0 0.0
  %98 = vmatpush1.xpose.msra.mxu0 %v54
  %99 = vmatprep.subr.mxu0 0.0
  %100 = vmatpush1.xpose.msra.mxu0 %v57
  %101 = vmatprep.subr.mxu0 0.0
  %102 = vmatpush1.xpose.msra.mxu0 %v60
  %103 = vmatprep.subr.mxu0 0.0
  %104 = vmatpush1.xpose.msra.mxu0 %v63
  %105 = vmatprep.subr.mxu0 0.0
  %106 = vmatpush1.xpose.msra.mxu0 %v66
  %107 = vmatprep.subr.mxu0 0.0
  %108 = vmatpush1.xpose.msra.mxu0 %v69
  %109 = vmatprep.subr.mxu0 0.0
  %110 = vmatpush1.xpose.msra.mxu0 %v72
  %111 = vmatprep.subr.mxu0 0.0
  %112 = vmatpush1.xpose.msra.mxu0 %v75
  %113 = vmatprep.subr.mxu0 0.0
  %114 = vmatpush1.xpose.msra.mxu0 %v78
  %115 = vmatprep.subr.mxu0 0.0
  %116 = vmatpush1.xpose.msra.mxu0 %v81
  %117 = vmatprep.subr.mxu0 0.0
  %118 = vmatpush1.xpose.msra.mxu0 %v84
  %119 = vmatprep.subr.mxu0 0.0
  %120 = vmatpush1.xpose.msra.mxu0 %v87
  %121 = vmatprep.subr.mxu0 0.0
  %122 = vmatpush1.xpose.msra.mxu0 0.0
  %123 = vmatprep.subr.mxu0 0.0
  %124 = vmatpush1.xpose.msra.mxu0 0.0
  %125 = vmatprep.subr.mxu0 0.0
  %126 = vmatpush1.xpose.msra.mxu0 0.0
  %127 = vmatprep.subr.mxu0 0.0
  %128 = vmatpush1.xpose.msra.mxu0 0.0
  %129 = vmatprep.subr.mxu0 0.0
  %130 = vmatpush1.xpose.msra.mxu0 0.0
  %131 = vmatprep.subr.mxu0 0.0
  %132 = vmatpush1.xpose.msra.mxu0 0.0
  %133 = vmatprep.subr.mxu0 0.0
  %134 = vmatpush1.xpose.msra.mxu0 0.0
  %135 = vmatprep.subr.mxu0 0.0
  %136 = vmatpush1.xpose.msra.mxu0 0.0
  %137 = vmatprep.subr.mxu0 0.0
  %138 = vmatpush1.xpose.msra.mxu0 0.0
  %139 = vmatprep.subr.mxu0 0.0
  %140 = vmatpush1.xpose.msra.mxu0 0.0
  %141 = vmatprep.subr.mxu0 0.0
  %142 = vmatpush1.xpose.msra.mxu0 0.0
  %143 = vmatprep.subr.mxu0 0.0
  %144 = vmatpush1.xpose.msra.mxu0 0.0
  %145 = vmatprep.subr.mxu0 0.0
  %146 = vmatpush1.xpose.msra.mxu0 0.0
  %147 = vmatprep.subr.mxu0 0.0
  %148 = vmatpush1.xpose.msra.mxu0 0.0
  %149 = vmatprep.subr.mxu0 0.0
  %150 = vmatpush1.xpose.msra.mxu0 0.0
  %151 = vmatprep.subr.mxu0 0.0
  %152 = vmatpush1.xpose.msra.mxu0 0.0
  %153 = vmatprep.mubr.f32.mxu0 0.0
  %154 = vmatmul.mubr.f32.gmra.mrb[0].mxu0 %v39
  %v155 = vpop.f32.mrb[0].mxu0
  %v156 = vadd.f32 0.0, %v155
  %v157 = vpop.f32.mrb[0].mxu0
  %158 = vdwg.mxu0
  %v159 = vadd.f32 %v36, %v156
  %160 = vst [vmem:[#allocation2] sm:$0xff] %v159
  // Predicated region
  $region18: #{tpu_custom_call.1} parent=0 // pred_check
    %p161 = pneg %p14
  $region19: #{tpu_custom_call.1} parent=0 // pred_check_branch
    %163 = sbr.rel (%p161) target = $region21
  $region20: #{tpu_custom_call.1} parent=0 // pred_region
    %v164 = vld [vmem:[#allocation2] sm:$0xff]
    %v165 = vld [vmem:[%s2] sm:$0x1]
    %v167 = vlaneseq
    %v168 = vshrl.u32 %v167, 7
    %v169 = vsub.s32 0, %v168
    %v170 = vrot.slane %v165, %v169
    %v172 = vadd.f32 %v164, %v170
    %173 = vmax.xlane.f32.xlu0 %v172
    %v174 = vpop.xlane.xlu0 %173
    %v175 = vsub.f32 %v172, %v174
    %v176 = vmul.f32 %v175, 1.442695
    %v177 = vpow.pop %v176
    %178 = vadd.xlane.f32.xlu0 %v177
    %v179 = vpop.xlane.xlu0 %178
    %v180 = vrcp.pop %v179
    %v181 = vmul.f32 %v177, %v180
    %vm182 = vcmask 31744
    %183 = vst.msk [vmem:[%s3] sm:$0xff] %vm182, %v181
  $region21: #{tpu_custom_call.1} parent=0 // pred_fallthru
    _
  // Predicated region
  $region22: #{tpu_custom_call.1} parent=0 // pred_check
    _
  $region23: #{tpu_custom_call.1} parent=0 // pred_check_branch
    %185 = sbr.rel (0) target = $region25
  $region24: #{tpu_custom_call.1} parent=0 // pred_region
    _
  $region25: #{tpu_custom_call.1} parent=0 // pred_fallthru
    _
  // Predicated region
  $region26: #{tpu_custom_call.1} parent=0 // pred_check
    _
  $region27: #{tpu_custom_call.1} parent=0 // pred_check_branch
    %187 = sbr.rel (0) target = $region29
  $region28: #{tpu_custom_call.1} parent=0 // pred_region
    _
  $region29: #{tpu_custom_call.1} parent=0 // pred_fallthru
    _

</llo_original>
